<compile_context>
chip_gen: v5e
topology: v5e:2x2
jax: 0.10.0
libtpu: 0.0.40
codegen_flags: <defaults>
</compile_context>

<pallas_src>
import functools

import jax
import jax.numpy as jnp
from jax.experimental import pallas as pl
from jax.experimental.pallas import tpu as pltpu


def _ss_attention_kernel(x_ref, w1t_ref, w2t_ref, o_ref, *, inv_hw):
    # x_ref  : (TB, C, HWp)  block of TB batch elements, spatial flattened + lane-padded
    # w1t_ref: (C, C//r)     first Linear weight, pre-transposed (pooled @ w1t)
    # w2t_ref: (C//r, C)     second Linear weight, pre-transposed (h @ w2t)
    # o_ref  : (TB, C, HWp)
    x = x_ref[...]

    # AdaptiveAvgPool2d(1): sum over the lane (spatial) axis in f32 — zero padding
    # contributes nothing — then divide by the true H*W.  No full-tile f32 copy.
    pooled = jnp.sum(x, axis=-1, dtype=jnp.float32) * inv_hw        # (TB, C)

    # fc: Linear(C -> C//r, no bias) -> ReLU -> Linear(C//r -> C, no bias) -> Sigmoid
    h = jnp.dot(pooled, w1t_ref[...].astype(jnp.float32),
                preferred_element_type=jnp.float32)                 # (TB, C//r)
    h = jnp.maximum(h, 0.0)
    y = jnp.dot(h, w2t_ref[...].astype(jnp.float32),
                preferred_element_type=jnp.float32)                 # (TB, C)
    y = jax.nn.sigmoid(y)

    # x * y.expand_as(x): broadcast the per-(batch, channel) gate across spatial lanes.
    o_ref[...] = (x * y[:, :, None].astype(o_ref.dtype)).astype(o_ref.dtype)


def _pick_batch_tile(b, c, hw_pad, itemsize, vmem_budget_bytes):
    """Largest divisor of b whose double-buffered in+out block (~4x block bytes)
    fits the VMEM budget, while keeping >= 2 grid steps when b >= 2 so
    dimension_semantics=('parallel',) can shard across v7x's two TensorCores."""
    max_tb = max(1, b // 2) if b >= 2 else 1
    per_elem = c * hw_pad * itemsize
    best = 1
    for tb in range(1, max_tb + 1):
        if b % tb != 0:
            continue
        if 4 * tb * per_elem <= vmem_budget_bytes:
            best = tb
    return best


def ss_attention(x, w1, w2):
    """x: (B, C, H, W); w1: (C//r, C); w2: (C, C//r)  (PyTorch Linear layouts)."""
    b, c, h, w = x.shape
    hw = h * w
    hw_pad = ((hw + 127) // 128) * 128          # lane-dense last dim
    hidden = w1.shape[0]
    itemsize = jnp.dtype(x.dtype).itemsize

    x_flat = x.reshape(b, c, hw)
    if hw_pad != hw:
        x_flat = jnp.pad(x_flat, ((0, 0), (0, 0), (0, hw_pad - hw)))

    # Pre-transpose the tiny weights once in the wrapper so the kernel runs plain
    # row-major matmuls (no in-kernel transpose through the XLU).
    w1t = w1.T                                   # (C, C//r)
    w2t = w2.T                                   # (C//r, C)

    # 48 MiB scoped VMEM is safe on v5e/v6e (128 MiB physical) and v7x (64 MiB);
    # tile selection keeps the double-buffered footprint well under it.
    vmem_limit = 48 << 20
    tb = _pick_batch_tile(b, c, hw_pad, itemsize, vmem_budget_bytes=40 << 20)
    grid = (b // tb,)

    kernel = functools.partial(_ss_attention_kernel, inv_hw=1.0 / float(hw))

    # Advisory cost hint: this kernel is pure HBM bandwidth (read x + write x*gate).
    cost = pl.CostEstimate(
        flops=2 * b * c * hw_pad + 4 * b * c * hidden,
        transcendentals=b * c,
        bytes_accessed=2 * b * c * hw_pad * itemsize + 2 * c * hidden * 4,
    )

    # Note: input_output_aliases={0: 0} would donate x's HBM buffer, but x_flat may
    # alias the caller's x under jit when no padding is needed, so it is omitted here.
    out_flat = pl.pallas_call(
        kernel,
        out_shape=jax.ShapeDtypeStruct((b, c, hw_pad), x.dtype),
        grid_spec=pltpu.PrefetchScalarGridSpec(
            num_scalar_prefetch=0,
            grid=grid,
            in_specs=[
                pl.BlockSpec((tb, c, hw_pad), lambda i: (i, 0, 0)),
                pl.BlockSpec((c, hidden), lambda i: (0, 0)),
                pl.BlockSpec((hidden, c), lambda i: (0, 0)),
            ],
            out_specs=pl.BlockSpec((tb, c, hw_pad), lambda i: (i, 0, 0)),
        ),
        compiler_params=pltpu.CompilerParams(
            dimension_semantics=("parallel",),
            vmem_limit_bytes=vmem_limit,
        ),
        cost_estimate=cost,
    )(x_flat, w1t, w2t)

    if hw_pad != hw:
        out_flat = out_flat[..., :hw]
    return out_flat.reshape(b, c, h, w)


def ss_attention_ref(x, w1, w2):
    """Pure-JAX reference mirroring the PyTorch forward."""
    y = jnp.mean(x, axis=(2, 3))                 # AdaptiveAvgPool2d(1) -> (B, C)
    y = jnp.maximum(y @ w1.T, 0.0)               # Linear + ReLU
    y = jax.nn.sigmoid(y @ w2.T)                 # Linear + Sigmoid
    return x * y[:, :, None, None]               # broadcast scale


if __name__ == "__main__":
    # Small shapes consistent with the module: channel=32, reduction=16 -> hidden=2.
    # B=4 exercises the batched (TB=2, grid=2) path.
    B, C, H, W = 4, 32, 16, 16
    REDUCTION = 16
    HIDDEN = C // REDUCTION

    key = jax.random.PRNGKey(0)
    kx, k1, k2 = jax.random.split(key, 3)

    x = jax.random.normal(kx, (B, C, H, W), dtype=jnp.float32)
    # Deterministic (xavier-uniform-like) init for the two no-bias Linears.
    lim1 = (6.0 / (C + HIDDEN)) ** 0.5
    lim2 = (6.0 / (HIDDEN + C)) ** 0.5
    w1 = jax.random.uniform(k1, (HIDDEN, C), minval=-lim1, maxval=lim1, dtype=jnp.float32)
    w2 = jax.random.uniform(k2, (C, HIDDEN), minval=-lim2, maxval=lim2, dtype=jnp.float32)

    out = jax.block_until_ready(ss_attention(x, w1, w2))
    ref = jax.block_until_ready(ss_attention_ref(x, w1, w2))

    assert out.shape == (B, C, H, W)
    assert jnp.allclose(out, ref, atol=1e-5, rtol=1e-5), "mismatch vs reference"
    print("KERNEL_OK")
</pallas_src>

<mosaic_0001>
module attributes {stable_mosaic.version = 11 : i64} {
  func.func @_ss_attention_kernel(%arg0: i32, %arg1: memref<2x32x256xf32, #tpu.memory_space<vmem>>, %arg2: memref<32x2xf32, #tpu.memory_space<vmem>>, %arg3: memref<2x32xf32, #tpu.memory_space<vmem>>, %arg4: memref<2x32x256xf32, #tpu.memory_space<vmem>>) attributes {dimension_semantics = [#tpu.dimension_semantics<parallel>], iteration_bounds = array<i64: 2>, scalar_prefetch = 0 : i64, scratch_operands = 0 : i64, tpu.core_type = #tpu.core_type<tc>, window_params = [{transform_indices = @transform_0, window_bounds = array<i64: 2, 32, 256>}, {pipeline_mode = #tpu.pipeline_mode<synchronous>, transform_indices = @transform_1, window_bounds = array<i64: 32, 2>}, {pipeline_mode = #tpu.pipeline_mode<synchronous>, transform_indices = @transform_2, window_bounds = array<i64: 2, 32>}, {transform_indices = @transform_3, window_bounds = array<i64: 2, 32, 256>}]} {
    %c0 = arith.constant 0 : index
    %c0_0 = arith.constant 0 : index
    %c0_1 = arith.constant 0 : index
    %0 = vector.load %arg1[%c0, %c0_0, %c0_1] : memref<2x32x256xf32, #tpu.memory_space<vmem>>, vector<2x32x256xf32>
    %cst = arith.constant dense<0.000000e+00> : vector<2x32xf32>
    %1 = vector.multi_reduction <add>, %0, %cst [2] : vector<2x32x256xf32> to vector<2x32xf32>
    %cst_2 = arith.constant 3.906250e-03 : f32
    %2 = vector.broadcast %cst_2 : f32 to vector<2x32xf32>
    %3 = arith.mulf %1, %2 : vector<2x32xf32>
    %c0_3 = arith.constant 0 : index
    %c0_4 = arith.constant 0 : index
    %4 = vector.load %arg2[%c0_3, %c0_4] : memref<32x2xf32, #tpu.memory_space<vmem>>, vector<32x2xf32>
    %cst_5 = arith.constant dense<0.000000e+00> : vector<2x2xf32>
    %5 = tpu.matmul %3, %4, %cst_5 {dimension_numbers = #tpu.dot_dimension_numbers<[1], [0], [0], [1], [0, 0, 1, 1], [], []>} : vector<2x32xf32>, vector<32x2xf32>, vector<2x2xf32> -> vector<2x2xf32>
    %cst_6 = arith.constant 0.000000e+00 : f32
    %6 = vector.broadcast %cst_6 : f32 to vector<2x2xf32>
    %7 = arith.maximumf %5, %6 : vector<2x2xf32>
    %c0_7 = arith.constant 0 : index
    %c0_8 = arith.constant 0 : index
    %8 = vector.load %arg3[%c0_7, %c0_8] : memref<2x32xf32, #tpu.memory_space<vmem>>, vector<2x32xf32>
    %cst_9 = arith.constant dense<0.000000e+00> : vector<2x32xf32>
    %9 = tpu.matmul %7, %8, %cst_9 {dimension_numbers = #tpu.dot_dimension_numbers<[1], [0], [0], [1], [0, 0, 1, 1], [], []>} : vector<2x2xf32>, vector<2x32xf32>, vector<2x32xf32> -> vector<2x32xf32>
    %10 = arith.negf %9 : vector<2x32xf32>
    %11 = math.exp %10 : vector<2x32xf32>
    %cst_10 = arith.constant 1.000000e+00 : f32
    %12 = vector.broadcast %cst_10 : f32 to vector<2x32xf32>
    %13 = arith.addf %12, %11 : vector<2x32xf32>
    %14 = arith.divf %12, %13 : vector<2x32xf32>
    %15 = vector.shape_cast %14 : vector<2x32xf32> to vector<2x32x1xf32>
    %16 = vector.broadcast %15 : vector<2x32x1xf32> to vector<2x32x256xf32>
    %17 = arith.mulf %0, %16 : vector<2x32x256xf32>
    %c0_11 = arith.constant 0 : index
    %c0_12 = arith.constant 0 : index
    %c0_13 = arith.constant 0 : index
    %18 = vector.load %arg4[%c0_11, %c0_12, %c0_13] : memref<2x32x256xf32, #tpu.memory_space<vmem>>, vector<2x32x256xf32>
    tpu.vector_store %arg4[%c0_11, %c0_12, %c0_13], %17 {strides = array<i32>} : memref<2x32x256xf32, #tpu.memory_space<vmem>>, vector<2x32x256xf32>,
    return
  }
  func.func @transform_0(%arg0: i32) -> (i32, i32, i32) {
    %c0_i32 = arith.constant 0 : i32
    %c0_i32_0 = arith.constant 0 : i32
    %c0_i32_1 = arith.constant 0 : i32
    return %arg0, %c0_i32, %c0_i32_0 : i32, i32, i32
  }
  func.func @transform_1(%arg0: i32) -> (i32, i32) {
    %c0_i32 = arith.constant 0 : i32
    %c0_i32_0 = arith.constant 0 : i32
    %c0_i32_1 = arith.constant 0 : i32
    return %c0_i32, %c0_i32_0 : i32, i32
  }
  func.func @transform_2(%arg0: i32) -> (i32, i32) {
    %c0_i32 = arith.constant 0 : i32
    %c0_i32_0 = arith.constant 0 : i32
    %c0_i32_1 = arith.constant 0 : i32
    return %c0_i32, %c0_i32_0 : i32, i32
  }
  func.func @transform_3(%arg0: i32) -> (i32, i32, i32) {
    %c0_i32 = arith.constant 0 : i32
    %c0_i32_0 = arith.constant 0 : i32
    %c0_i32_1 = arith.constant 0 : i32
    return %arg0, %c0_i32, %c0_i32_0 : i32, i32, i32
  }
}

</mosaic_0001>

<llo_original>
// kernel: tpu_custom_call.1
$region0: #{tpu_custom_call.1}
  #allocation0 [shape = 'u32[]', space=smem, size = 0x4, offset = 0x4, fixed_abs, tag = 'smem constant byte address 0x4 - core index']
  #allocation1 [shape = 'u32[72,128]{1,0:T(1,128)}', space=vmem, size = 0x9000, scoped, tag = 'internal scratch']
  %s0 = inlined_call_operand.hbm [shape: f32[4,32,256], index: 0, kind: input, shape index: {}]
  %s1 = inlined_call_operand.vmem [shape: f32[32,2], index: 1, kind: input, shape index: {}]
  %s2 = inlined_call_operand.vmem [shape: f32[2,32], index: 2, kind: input, shape index: {}]
  %s3 = inlined_call_operand.hbm [shape: f32[4,32,256], index: 3, kind: output, shape index: {}]
  %s4 = sld [smem:[#allocation0]]
  $region49: #{tpu_custom_call.1} parent=0
    _
  %s6 = ssub.s32 1, %s4
  %s7 = scalar_select 0, %s6, %s4
  $region1: #{tpu_custom_call.1} parent=0
    #allocation2 [shape = 'u8[131072]{0}', space=vmem, size = 0x20000, scoped, tag = 'input window, operand 0']
    #allocation3 [shape = 's32[2]{0}', space=sflag, size = 0x8, scoped, tag = 'scoped memory for tpu_custom_call.1']
    #allocation4 [shape = 's32[2]{0}', space=sflag, size = 0x8, scoped, tag = 'scoped memory for tpu_custom_call.1']
    #allocation5 [shape = 'u8[131072]{0}', space=vmem, size = 0x20000, scoped, tag = 'output window, operand 0']
    %8 = vsyncpa [#allocation3], 0
    %s9 = scalar_lea.sflag [#allocation3], 1
    %10 = vsyncpa %s9, 0
    %11 = vsyncpa [#allocation4], 0
    %s12 = scalar_lea.sflag [#allocation4], 1
    %13 = vsyncpa %s12, 0
    loop: start=0, step=1, limit=4
    $region2: #{tpu_custom_call.1} parent=1 // loop_pre_header
      _
    $region3: #{tpu_custom_call.1} parent=1 // loop_header
      %s15 = sphi 0, %s19
      %p16 = scmp.ge.s32.totalorder %s15, 4
      %s25 = sphi 0, %s27
      %s28 = sphi 0, %s25
      %s29 = sphi 0, %s28
      %s45 = sphi 0, %s29
      %s49 = sphi 0, %s49
      %s51 = sphi 0, %s49
      %s52 = sphi 0, %s51
      %s66 = sphi 0, %s52
      %s70 = sphi 0, %s70
      %s72 = sphi 0, %s70
      %s73 = sphi 0, %s72
      %s87 = sphi 0, %s73
      %s93 = sphi 0, %s95
      %s96 = sphi 0, %s93
      %s97 = sphi 0, %s96
      %s113 = sphi 0, %s97
    $region4: #{tpu_custom_call.1} parent=1 // loop_header_branch
      %18 = sbr.rel (%p16) target = $region8
    $region5: #{tpu_custom_call.1} parent=1 // loop_body
      %s20 = ssub.s32 %s15, 1
      %s21 = ssub.s32 %s15, 2
      %s22 = sadd.s32 %s15, 1
      %s23 = ssub.s32 %s15, %s22
      %p24 = scmp.eq.s32.totalorder %s23, 0
      %s26 = sadd.s32 %s25, 1
      %s27 = scalar_select %p24, %s25, %s26
      %p30 = pneg %p24
      %p31 = scmp.eq.s32.totalorder %s15, 1
      %p32 = por %p30, %p31
      %p33 = scmp.ne.s32.totalorder %s25, %s28
      %p34 = scmp.eq.s32.totalorder %s15, 0
      %p35 = por %p33, %p34
      %p36 = scmp.ne.s32.totalorder %s25, %s28
      %p37 = scmp.eq.s32.totalorder %s20, 1
      %p38 = por %p36, %p37
      %p39 = scmp.ne.s32.totalorder %s28, %s29
      %p40 = scmp.eq.s32.totalorder %s20, 0
      %p41 = por %p39, %p40
      %p42 = scmp.ne.s32.totalorder %s28, %s29
      %p43 = scmp.eq.s32.totalorder %s21, 1
      %p44 = por %p42, %p43
      %p46 = scmp.ne.s32.totalorder %s29, %s45
      %p47 = scmp.eq.s32.totalorder %s21, 0
      %p48 = por %p46, %p47
      %s50 = sadd.s32 %s49, 1
      %p53 = scmp.eq.s32.totalorder %s15, 1
      %p54 = scmp.ne.s32.totalorder %s49, %s51
      %p55 = scmp.eq.s32.totalorder %s15, 0
      %p56 = por %p54, %p55
      %p57 = scmp.ne.s32.totalorder %s49, %s51
      %p58 = scmp.eq.s32.totalorder %s20, 1
      %p59 = por %p57, %p58
      %p60 = scmp.ne.s32.totalorder %s51, %s52
      %p61 = scmp.eq.s32.totalorder %s20, 0
      %p62 = por %p60, %p61
      %p63 = scmp.ne.s32.totalorder %s51, %s52
      %p64 = scmp.eq.s32.totalorder %s21, 1
      %p65 = por %p63, %p64
      %p67 = scmp.ne.s32.totalorder %s52, %s66
      %p68 = scmp.eq.s32.totalorder %s21, 0
      %p69 = por %p67, %p68
      %s71 = sadd.s32 %s70, 1
      %p74 = scmp.eq.s32.totalorder %s15, 1
      %p75 = scmp.ne.s32.totalorder %s70, %s72
      %p76 = scmp.eq.s32.totalorder %s15, 0
      %p77 = por %p75, %p76
      %p78 = scmp.ne.s32.totalorder %s70, %s72
      %p79 = scmp.eq.s32.totalorder %s20, 1
      %p80 = por %p78, %p79
      %p81 = scmp.ne.s32.totalorder %s72, %s73
      %p82 = scmp.eq.s32.totalorder %s20, 0
      %p83 = por %p81, %p82
      %p84 = scmp.ne.s32.totalorder %s72, %s73
      %p85 = scmp.eq.s32.totalorder %s21, 1
      %p86 = por %p84, %p85
      %p88 = scmp.ne.s32.totalorder %s73, %s87
      %p89 = scmp.eq.s32.totalorder %s21, 0
      %p90 = por %p88, %p89
      %s91 = ssub.s32 %s15, %s22
      %p92 = scmp.eq.s32.totalorder %s91, 0
      %s94 = sadd.s32 %s93, 1
      %s95 = scalar_select %p92, %s93, %s94
      %p98 = pneg %p92
      %p99 = scmp.eq.s32.totalorder %s15, 1
      %p100 = por %p98, %p99
      %p101 = scmp.ne.s32.totalorder %s93, %s96
      %p102 = scmp.eq.s32.totalorder %s15, 0
      %p103 = por %p101, %p102
      %p104 = scmp.ne.s32.totalorder %s93, %s96
      %p105 = scmp.eq.s32.totalorder %s20, 1
      %p106 = por %p104, %p105
      %p107 = scmp.ne.s32.totalorder %s96, %s97
      %p108 = scmp.eq.s32.totalorder %s20, 0
      %p109 = por %p107, %p108
      %p110 = scmp.ne.s32.totalorder %s96, %s97
      %p111 = scmp.eq.s32.totalorder %s21, 1
      %p112 = por %p110, %p111
      %p114 = scmp.ne.s32.totalorder %s97, %s113
      %p115 = scmp.eq.s32.totalorder %s21, 0
      %p116 = por %p114, %p115
      %p117 = scmp.le.s32.totalorder 1, %s15
      %p118 = scmp.lt.s32.totalorder %s15, 3
      %p119 = pnand %p117, %p118
      %p120 = pneg %p119
      // Predicated region
      $region9: #{tpu_custom_call.1} parent=5 // pred_check
        _
      $region10: #{tpu_custom_call.1} parent=5 // pred_check_branch
        %122 = sbr.rel (%p119) target = $region12
      $region11: #{tpu_custom_call.1} parent=5 // pred_region
        %s123 = ssub.s32 %s15, 1
        // Predicated region
        $region13: #{tpu_custom_call.1} parent=11 // pred_check
          %p124 = pneg %p62
        $region14: #{tpu_custom_call.1} parent=11 // pred_check_branch
          %126 = sbr.rel (%p124) target = $region16
        $region15: #{tpu_custom_call.1} parent=11 // pred_region
          _
        $region16: #{tpu_custom_call.1} parent=11 // pred_fallthru
          _
        // Predicated region
        $region17: #{tpu_custom_call.1} parent=11 // pred_check
          %p127 = pneg %p83
        $region18: #{tpu_custom_call.1} parent=11 // pred_check_branch
          %129 = sbr.rel (%p127) target = $region20
        $region19: #{tpu_custom_call.1} parent=11 // pred_region
          _
        $region20: #{tpu_custom_call.1} parent=11 // pred_fallthru
          _
      $region12: #{tpu_custom_call.1} parent=5 // pred_fallthru
        _
      %p130 = scmp.lt.s32.totalorder %s15, 2
      // Predicated region
      $region21: #{tpu_custom_call.1} parent=5 // pred_check
        %p131 = pneg %p130
      $region22: #{tpu_custom_call.1} parent=5 // pred_check_branch
        %133 = sbr.rel (%p131) target = $region24
      $region23: #{tpu_custom_call.1} parent=5 // pred_region
        // Predicated region
        $region25: #{tpu_custom_call.1} parent=23 // pred_check
          %p134 = pneg %p35
        $region26: #{tpu_custom_call.1} parent=23 // pred_check_branch
          %136 = sbr.rel (%p134) target = $region28
        $region27: #{tpu_custom_call.1} parent=23 // pred_region
          %s137 = sand.u32 %s25, 1
          %s138 = scalar_lea.sflag [#allocation3], %s137
          %s139 = sand.u32 %s25, 1
          %s140 = smul.addr %s139, 128
          %s141 = scalar_lea.vmem [#allocation2], %s140
          %s142 = smul.u32 2, %s15
          %144 = vsyncadd %s138, 0
          %s145 = smul.addr %s142, 8
          %s146 = smul.addr %s145, 8
          %s147 = scalar_lea.hbm %s0, %s146
          %s148 = sshll.u32 %s147, 4
          %s149 = int_to_ptr.hbm [resolvable:$true] %s148
          %s150 = sshll.u32 %s141, 4
          %s151 = int_to_ptr.vmem [resolvable:$true] %s150
          %156 = dma.hbm_to_vmem [thread:$0]  %s149, 2048, %s151, %s138, 256, 256, 16
        $region28: #{tpu_custom_call.1} parent=23 // pred_fallthru
          _
      $region24: #{tpu_custom_call.1} parent=5 // pred_fallthru
        _
      %p157 = scmp.le.s32.totalorder 1, %s15
      %p158 = scmp.lt.s32.totalorder %s15, 3
      %p159 = pnand %p157, %p158
      %p160 = pneg %p159
      // Predicated region
      $region29: #{tpu_custom_call.1} parent=5 // pred_check
        _
      $region30: #{tpu_custom_call.1} parent=5 // pred_check_branch
        %162 = sbr.rel (%p159) target = $region32
      $region31: #{tpu_custom_call.1} parent=5 // pred_region
        %s163 = ssub.s32 %s15, 1
        %s164 = sand.u32 %s28, 1
        %s165 = scalar_lea.sflag [#allocation3], %s164
        %s166 = sand.u32 %s28, 1
        %s167 = smul.addr %s166, 128
        %s168 = scalar_lea.vmem [#allocation2], %s167
        // Predicated region
        $region33: #{tpu_custom_call.1} parent=31 // pred_check
          %p169 = pneg %p41
        $region34: #{tpu_custom_call.1} parent=31 // pred_check_branch
          %171 = sbr.rel (%p169) target = $region36
        $region35: #{tpu_custom_call.1} parent=31 // pred_region
          %173 = dma.done %s165, 2048
        $region36: #{tpu_custom_call.1} parent=31 // pred_fallthru
          _
        %s174 = sand.u32 %s28, 1
        %s175 = scalar_lea.sflag [#allocation3], %s174
        %s176 = sand.u32 %s28, 1
        %s177 = smul.addr %s176, 128
        %s178 = scalar_lea.vmem [#allocation2], %s177
        %p179 = pneg %p41
        %p180 = pneg %p38
        %p181 = pneg %p62
        %p182 = pneg %p59
        %p183 = pneg %p83
        %p184 = pneg %p80
        %p185 = pneg %p109
        %p186 = pneg %p106
        %s187 = sand.u32 %s96, 1
        %s188 = scalar_lea.sflag [#allocation4], %s187
        %s189 = sand.u32 %s96, 1
        %s190 = smul.addr %s189, 128
        %s191 = scalar_lea.vmem [#allocation5], %s190
        %s192 = smul.u32 2, %s20
        %s193 = smul.u32 2, %s20
        %v194 = vld [vmem:[%s168] sm:$0xff]
        %v195 = vld [vmem:[%s168 + $0x8] sm:$0xff]
        %v196 = vld [vmem:[%s168 + $0x10] sm:$0xff]
        %v197 = vld [vmem:[%s168 + $0x18] sm:$0xff]
        %v198 = vld [vmem:[%s168 + $0x20] sm:$0xff]
        %v199 = vld [vmem:[%s168 + $0x28] sm:$0xff]
        %v200 = vld [vmem:[%s168 + $0x30] sm:$0xff]
        %v201 = vld [vmem:[%s168 + $0x38] sm:$0xff]
        %v202 = vld [vmem:[%s168 + $0x40] sm:$0xff]
        %v203 = vld [vmem:[%s168 + $0x48] sm:$0xff]
        %v204 = vld [vmem:[%s168 + $0x50] sm:$0xff]
        %v205 = vld [vmem:[%s168 + $0x58] sm:$0xff]
        %v206 = vld [vmem:[%s168 + $0x60] sm:$0xff]
        %v207 = vld [vmem:[%s168 + $0x68] sm:$0xff]
        %v208 = vld [vmem:[%s168 + $0x70] sm:$0xff]
        %v209 = vld [vmem:[%s168 + $0x78] sm:$0xff]
        %v210 = vadd.f32 %v194, %v195
        %211 = vadd.xlane.f32.xlu0 %v210
        %v212 = vpop.xlane.xlu0 %211
        %v213 = vadd.f32 %v196, %v197
        %214 = vadd.xlane.f32.xlu0 %v213
        %v215 = vpop.xlane.xlu0 %214
        %v216 = vadd.f32 %v198, %v199
        %217 = vadd.xlane.f32.xlu0 %v216
        %v218 = vpop.xlane.xlu0 %217
        %v219 = vadd.f32 %v200, %v201
        %220 = vadd.xlane.f32.xlu0 %v219
        %v221 = vpop.xlane.xlu0 %220
        %v222 = vadd.f32 %v202, %v203
        %223 = vadd.xlane.f32.xlu0 %v222
        %v224 = vpop.xlane.xlu0 %223
        %v225 = vadd.f32 %v204, %v205
        %226 = vadd.xlane.f32.xlu0 %v225
        %v227 = vpop.xlane.xlu0 %226
        %v228 = vadd.f32 %v206, %v207
        %229 = vadd.xlane.f32.xlu0 %v228
        %v230 = vpop.xlane.xlu0 %229
        %v231 = vadd.f32 %v208, %v209
        %232 = vadd.xlane.f32.xlu0 %v231
        %v233 = vpop.xlane.xlu0 %232
        %v234 = vmul.f32 %v212, 0.00390625
        %v235 = vmul.f32 %v215, 0.00390625
        %v236 = vmul.f32 %v218, 0.00390625
        %v237 = vmul.f32 %v221, 0.00390625
        %v238 = vmul.f32 %v224, 0.00390625
        %v239 = vmul.f32 %v227, 0.00390625
        %v240 = vmul.f32 %v230, 0.00390625
        %v241 = vmul.f32 %v233, 0.00390625
        %v242 = vld [vmem:[%s1] sm:$0xff]
        %v243 = vld [vmem:[%s1 + $0x8] sm:$0xff]
        %v244 = vld [vmem:[%s1 + $0x10] sm:$0xff]
        %v245 = vld [vmem:[%s1 + $0x18] sm:$0xff]
        %v254 = vlaneseq
        %v255 = vand.u32 %v254, 127
        %v256 = vperm.slane %v234, %v255
        %v257 = vadd.s32 %v255, 4294967288
        %v258 = vperm.slane %v235, %v257
        %vm259 = vcmask 130112
        %v260 = vsel %vm259, %v258, %v256
        %v261 = vadd.s32 %v255, 4294967280
        %v262 = vperm.slane %v236, %v261
        %vm263 = vcmask 195712
        %v264 = vsel %vm263, %v262, %v260
        %v265 = vadd.s32 %v255, 4294967272
        %v266 = vperm.slane %v237, %v265
        %vm267 = vcmask 261312
        %v268 = vsel %vm267, %v266, %v264
        %v269 = vperm.slane %v238, %v255
        %v270 = vperm.slane %v239, %v257
        %v271 = vsel %vm259, %v270, %v269
        %v272 = vperm.slane %v240, %v261
        %v273 = vsel %vm263, %v272, %v271
        %v274 = vperm.slane %v241, %v265
        %v275 = vsel %vm267, %v274, %v273
        %vm276 = vcmask 1041409
        %v277 = vsel %vm276, %v275, %v268
        %vm278 = vcmask 261120
        %v279 = vsel %vm278, %v277, 0
        %281 = vmatpush.msra.mxu0 0.0
        %282 = vmatpush.msra.mxu0 0.0
        %283 = vmatpush.msra.mxu0 0.0
        %284 = vmatpush.msra.mxu0 0.0
        %285 = vmatpush.msra.mxu0 0.0
        %286 = vmatpush.msra.mxu0 0.0
        %287 = vmatpush.msra.mxu0 0.0
        %288 = vmatpush.msra.mxu0 0.0
        %289 = vmatpush.msra.mxu0 0.0
        %290 = vmatpush.msra.mxu0 0.0
        %291 = vmatpush.msra.mxu0 0.0
        %292 = vmatpush.msra.mxu0 0.0
        %293 = vmatpush.msra.mxu0 %v245
        %294 = vmatpush.msra.mxu0 %v244
        %295 = vmatpush.msra.mxu0 %v243
        %296 = vmatpush.msra.mxu0 %v242
        %297 = vmatmul.f32.gmra.mxu0 %v279
        %v298 = vpop.f32.mrf.mxu0
        %v299 = vadd.f32 0.0, %v298
        %300 = vdwg.mxu0
        %v301 = vmax.f32 %v299, 0.0
        %v302 = vld [vmem:[%s2] sm:$0x3]
        %vm303 = vcmask 15360
        %v305 = vsel %vm303, %v301, 0
        %vm307 = vcmask 1041408
        %v309 = vsel %vm307, %v302, 0
        %311 = vmatpush.msra.mxu0 0.0
        %312 = vmatpush.msra.mxu0 0.0
        %313 = vmatpush.msra.mxu0 0.0
        %314 = vmatpush.msra.mxu0 0.0
        %315 = vmatpush.msra.mxu0 0.0
        %316 = vmatpush.msra.mxu0 0.0
        %317 = vmatpush.msra.mxu0 0.0
        %318 = vmatpush.msra.mxu0 0.0
        %319 = vmatpush.msra.mxu0 0.0
        %320 = vmatpush.msra.mxu0 0.0
        %321 = vmatpush.msra.mxu0 0.0
        %322 = vmatpush.msra.mxu0 0.0
        %323 = vmatpush.msra.mxu0 0.0
        %324 = vmatpush.msra.mxu0 0.0
        %325 = vmatpush.msra.mxu0 0.0
        %326 = vmatpush.msra.mxu0 %v309
        %327 = vmatmul.f32.gmra.mxu0 %v305
        %v328 = vpop.f32.mrf.mxu0
        %v329 = vadd.f32 0.0, %v328
        %330 = vdwg.mxu0
        %v331 = vxor.u32 %v329, 2147483648
        %v332 = vmul.f32 %v331, 1.442695
        %v333 = vpow.pop %v332
        %v334 = vadd.f32 %v333, 1.0
        %v335 = vrcp.pop %v334
        %v336 = vmul.f32 %v334, %v335
        %v337 = vsub.f32 1.0, %v336
        %v338 = vmul.f32 %v335, %v337
        %v339 = vadd.f32 %v335, %v338
        %vm340 = vweird.f32 %v334
        %vm341 = vweird.f32 %v335
        %vm342 = vmor %vm340, %vm341
        %v343 = vsel %vm342, %v335, %v339
        %v344 = vand.u32 2147483647, %v334
        %vm345 = vcmp.eq.f32.partialorder %v344, 8.507059e+37
        %v346 = vand.u32 %v334, 2147483648
        %v347 = vor.u32 1.1754944e-38, %v346
        %v348 = vsel %vm345, %v347, %v343
        %v349 = vmul.f32 1.0, %v348
        %v350 = vperm.slane %v349, 0
        %v351 = vlaneseq
        %v352 = vshrl.u32 %v351, 7
        %354 = vset.pattern.permute.xlu0 %v352
        %355 = vperm.xlu0 %354, %v350
        %v356 = vpop.permute.xlu0 %355
        %v357 = vlaneseq
        %v358 = vshrl.u32 %v357, 7
        %v359 = vadd.s32 %v358, 8
        %360 = vset.pattern.permute.xlu0 %v359
        %361 = vperm.xlu0 %360, %v350
        %v362 = vpop.permute.xlu0 %361
        %v363 = vlaneseq
        %v364 = vshrl.u32 %v363, 7
        %v365 = vadd.s32 %v364, 16
        %366 = vset.pattern.permute.xlu0 %v365
        %367 = vperm.xlu0 %366, %v350
        %v368 = vpop.permute.xlu0 %367
        %v369 = vlaneseq
        %v370 = vshrl.u32 %v369, 7
        %v371 = vadd.s32 %v370, 24
        %372 = vset.pattern.permute.xlu0 %v371
        %373 = vperm.xlu0 %372, %v350
        %v374 = vpop.permute.xlu0 %373
        %v375 = vperm.slane %v349, 1
        %v376 = vlaneseq
        %v377 = vshrl.u32 %v376, 7
        %379 = vset.pattern.permute.xlu0 %v377
        %380 = vperm.xlu0 %379, %v375
        %v381 = vpop.permute.xlu0 %380
        %v382 = vlaneseq
        %v383 = vshrl.u32 %v382, 7
        %v384 = vadd.s32 %v383, 8
        %385 = vset.pattern.permute.xlu0 %v384
        %386 = vperm.xlu0 %385, %v375
        %v387 = vpop.permute.xlu0 %386
        %v388 = vlaneseq
        %v389 = vshrl.u32 %v388, 7
        %v390 = vadd.s32 %v389, 16
        %391 = vset.pattern.permute.xlu0 %v390
        %392 = vperm.xlu0 %391, %v375
        %v393 = vpop.permute.xlu0 %392
        %v394 = vlaneseq
        %v395 = vshrl.u32 %v394, 7
        %v396 = vadd.s32 %v395, 24
        %397 = vset.pattern.permute.xlu0 %v396
        %398 = vperm.xlu0 %397, %v375
        %v399 = vpop.permute.xlu0 %398
        %v400 = vmul.f32 %v194, %v356
        %v401 = vmul.f32 %v195, %v356
        %v402 = vmul.f32 %v196, %v362
        %v403 = vmul.f32 %v197, %v362
        %v404 = vmul.f32 %v198, %v368
        %v405 = vmul.f32 %v199, %v368
        %v406 = vmul.f32 %v200, %v374
        %v407 = vmul.f32 %v201, %v374
        %v408 = vmul.f32 %v202, %v381
        %v409 = vmul.f32 %v203, %v381
        %v410 = vmul.f32 %v204, %v387
        %v411 = vmul.f32 %v205, %v387
        %v412 = vmul.f32 %v206, %v393
        %v413 = vmul.f32 %v207, %v393
        %v414 = vmul.f32 %v208, %v399
        %v415 = vmul.f32 %v209, %v399
        %416 = vst [vmem:[%s191] sm:$0xff] %v400
        %417 = vst [vmem:[%s191 + $0x8] sm:$0xff] %v401
        %418 = vst [vmem:[%s191 + $0x10] sm:$0xff] %v402
        %419 = vst [vmem:[%s191 + $0x18] sm:$0xff] %v403
        %420 = vst [vmem:[%s191 + $0x20] sm:$0xff] %v404
        %421 = vst [vmem:[%s191 + $0x28] sm:$0xff] %v405
        %422 = vst [vmem:[%s191 + $0x30] sm:$0xff] %v406
        %423 = vst [vmem:[%s191 + $0x38] sm:$0xff] %v407
        %424 = vst [vmem:[%s191 + $0x40] sm:$0xff] %v408
        %425 = vst [vmem:[%s191 + $0x48] sm:$0xff] %v409
        %426 = vst [vmem:[%s191 + $0x50] sm:$0xff] %v410
        %427 = vst [vmem:[%s191 + $0x58] sm:$0xff] %v411
        %428 = vst [vmem:[%s191 + $0x60] sm:$0xff] %v412
        %429 = vst [vmem:[%s191 + $0x68] sm:$0xff] %v413
        %430 = vst [vmem:[%s191 + $0x70] sm:$0xff] %v414
        %431 = vst [vmem:[%s191 + $0x78] sm:$0xff] %v415
        %s432 = sand.u32 %s96, 1
        %s433 = scalar_lea.sflag [#allocation4], %s432
        %s434 = sand.u32 %s96, 1
        %s435 = smul.addr %s434, 128
        %s436 = scalar_lea.vmem [#allocation5], %s435
        // Predicated region
        $region37: #{tpu_custom_call.1} parent=31 // pred_check
          %p437 = pneg %p106
        $region38: #{tpu_custom_call.1} parent=31 // pred_check_branch
          %439 = sbr.rel (%p437) target = $region40
        $region39: #{tpu_custom_call.1} parent=31 // pred_region
          %s440 = smul.u32 2, %s20
          %442 = vsyncadd %s433, 0
          %s443 = smul.addr %s440, 8
          %s444 = smul.addr %s443, 8
          %s445 = scalar_lea.hbm %s3, %s444
          %s446 = sshll.u32 %s436, 4
          %s447 = int_to_ptr.vmem [resolvable:$true] %s446
          %s448 = sshll.u32 %s445, 4
          %s449 = int_to_ptr.hbm [resolvable:$true] %s448
          %454 = dma.vmem_to_hbm [thread:$0]  %s447, 2048, %s449, %s433, 256, 256, 16
        $region40: #{tpu_custom_call.1} parent=31 // pred_fallthru
          _
      $region32: #{tpu_custom_call.1} parent=5 // pred_fallthru
        _
      %p455 = scmp.le.s32.totalorder 2, %s15
      // Predicated region
      $region41: #{tpu_custom_call.1} parent=5 // pred_check
        %p456 = pneg %p455
      $region42: #{tpu_custom_call.1} parent=5 // pred_check_branch
        %458 = sbr.rel (%p456) target = $region44
      $region43: #{tpu_custom_call.1} parent=5 // pred_region
        %s459 = ssub.s32 %s15, 2
        // Predicated region
        $region45: #{tpu_custom_call.1} parent=43 // pred_check
          %p460 = pneg %p112
        $region46: #{tpu_custom_call.1} parent=43 // pred_check_branch
          %462 = sbr.rel (%p460) target = $region48
        $region47: #{tpu_custom_call.1} parent=43 // pred_region
          %s463 = sand.u32 %s97, 1
          %s464 = scalar_lea.sflag [#allocation4], %s463
          %s465 = sand.u32 %s97, 1
          %s466 = smul.addr %s465, 128
          %s467 = scalar_lea.vmem [#allocation5], %s466
          %469 = dma.done %s464, 2048
        $region48: #{tpu_custom_call.1} parent=43 // pred_fallthru
          _
      $region44: #{tpu_custom_call.1} parent=5 // pred_fallthru
        _
    $region6: #{tpu_custom_call.1} parent=1 // loop_footer
      %s19 = sadd.s32 1, %s15
    $region7: #{tpu_custom_call.1} parent=1 // loop_footer_branch
      %14 = sbr.rel target = $region3
    $region8: #{tpu_custom_call.1} parent=1 // loop_exit
      _
    %470 = vsyncpa [#allocation3], 1
    %s471 = scalar_lea.sflag [#allocation3], 1
    %472 = vsyncpa %s471, 1
    %473 = vsyncpa [#allocation4], 1
    %s474 = scalar_lea.sflag [#allocation4], 1
    %475 = vsyncpa %s474, 1

</llo_original>
